<compile_context>
chip_gen: v5e
topology: v5e:2x2
jax: 0.10.0
libtpu: 0.0.40
codegen_flags: <defaults>
</compile_context>

<pallas_src>
from functools import lru_cache, partial

import numpy as np
import jax
import jax.numpy as jnp
from jax.experimental import pallas as pl
from jax.experimental.pallas import tpu as pltpu


# ----------------------------------------------------------------------------
# Host-side (numpy) construction of the composed bicubic-downsample operators.
# ----------------------------------------------------------------------------

def _cubic_half_weights_np():
    """PyTorch cubic convolution weights (A=-0.75) at fractional offset t=0.5."""
    A, t = -0.75, 0.5

    def c1(x):  # |x| <= 1
        return ((A + 2.0) * x - (A + 3.0)) * x * x + 1.0

    def c2(x):  # 1 < |x| < 2
        return ((A * x - 5.0 * A) * x + 8.0 * A) * x - 4.0 * A

    return np.array([c2(t + 1.0), c1(t), c1(1.0 - t), c2(2.0 - t)], dtype=np.float64)


@lru_cache(maxsize=None)
def _downsample_matrix_np(n_in):
    """(n_out, n_in) matrix M with out = M @ in reproducing 1-D bicubic x0.5."""
    n_out = n_in // 2  # floor rule, matches F.interpolate
    w = _cubic_half_weights_np()
    M = np.zeros((n_out, n_in), np.float64)
    i = np.arange(n_out)
    for k in range(4):
        idx = np.clip(2 * i - 1 + k, 0, n_in - 1)  # border replication
        np.add.at(M, (i, idx), w[k])
    return M


@lru_cache(maxsize=None)
def _composed_matrices_np(h_in, w_in, n_iter):
    """Compose n_iter downsample steps into (dh_total, dw_total^T) in f64."""
    dh = np.eye(h_in, dtype=np.float64)
    dw = np.eye(w_in, dtype=np.float64)
    h, w = h_in, w_in
    for _ in range(n_iter):
        dh = _downsample_matrix_np(h) @ dh
        dw = _downsample_matrix_np(w) @ dw
        h //= 2
        w //= 2
    # dh: (Ho, H);  dw^T: (W, Wo) -- already transposed for the kernel.
    return dh.astype(np.float32), dw.T.astype(np.float32)


# ----------------------------------------------------------------------------
# Pallas kernel: one fused separable resample over a batch of TB images.
# ----------------------------------------------------------------------------

def _fused_downsample_kernel(dh_ref, dwT_ref, x_ref, o_ref):
    # dh_ref: (Ho, H), dwT_ref: (W, Wo), x_ref: (TB, H, W), o_ref: (TB, Ho, Wo)
    TB, H, W = x_ref.shape
    Ho = dh_ref.shape[0]
    Wo = dwT_ref.shape[1]

    x = x_ref[...].astype(jnp.float32)                       # (TB, H, W)

    # Lane-axis (W) contraction as ONE flattened 2-D MXU matmul.
    y = jnp.dot(x.reshape(TB * H, W), dwT_ref[...],
                preferred_element_type=jnp.float32)          # (TB*H, Wo)
    y = y.reshape(TB, H, Wo)

    # Sublane-axis (H) contraction as a batched matmul (proper batch dims,
    # same pattern as the flash-attention einsums in the Pallas reference).
    dh_b = jnp.broadcast_to(dh_ref[...], (TB, Ho, H))
    out = jnp.einsum('boh,bhw->bow', dh_b, y,
                     preferred_element_type=jnp.float32)     # (TB, Ho, Wo)

    o_ref[...] = out.astype(o_ref.dtype)


def _pick_block_batch(B, H, W, Ho, Wo, itemsize):
    """Largest images-per-step batch that (a) fits a v7x-safe VMEM budget with
    double-buffering and (b) leaves >=2 grid blocks for the two v7x TCs."""
    f32 = 4
    fixed = 2 * (Ho * H + W * Wo) * f32            # filter matrices (dbl-buffered)
    per_img = (2 * H * W * itemsize                # x block (double-buffered)
               + 2 * Ho * Wo * itemsize            # out block (double-buffered)
               + H * W * f32                       # f32 upcast of x
               + H * Wo * f32                      # W-contracted intermediate
               + (Ho * H + Ho * Wo) * f32)         # broadcast dh + einsum result
    budget = 32 * 1024 * 1024                      # safe inside v7x's 64 MiB VMEM
    tb = max(1, (budget - fixed) // per_img)
    tb = min(tb, B, 64)
    if B >= 2:
        tb = min(tb, pl.cdiv(B, 2))                # keep >=2 blocks (v7x megacore)
    return max(1, int(tb))


def _fused_bicubic_downsample(x_bhw, dh, dwT, tb):
    B, H, W = x_bhw.shape            # B is already padded to a multiple of tb
    Ho = dh.shape[0]
    Wo = dwT.shape[1]
    grid = (B // tb,)
    return pl.pallas_call(
        _fused_downsample_kernel,
        out_shape=jax.ShapeDtypeStruct((B, Ho, Wo), x_bhw.dtype),
        grid=grid,
        in_specs=[
            pl.BlockSpec((Ho, H), lambda b: (0, 0)),
            pl.BlockSpec((W, Wo), lambda b: (0, 0)),
            pl.BlockSpec((tb, H, W), lambda b: (b, 0, 0)),
        ],
        out_specs=pl.BlockSpec((tb, Ho, Wo), lambda b: (b, 0, 0)),
        compiler_params=pltpu.CompilerParams(
            dimension_semantics=("parallel",),
            vmem_limit_bytes=64 * 1024 * 1024,
        ),
    )(dh, dwT, x_bhw)


@partial(jax.jit, static_argnums=(1,))
def _downsample_impl(img, n_iter):
    N, C, H, W = img.shape
    dh_np, dwT_np = _composed_matrices_np(H, W, n_iter)
    Ho, Wo = dh_np.shape[0], dwT_np.shape[1]
    dh = jnp.asarray(dh_np)
    dwT = jnp.asarray(dwT_np)

    B = N * C
    x = img.reshape(B, H, W)
    tb = _pick_block_batch(B, H, W, Ho, Wo, img.dtype.itemsize)
    # TODO(synk): for single images too large for one VMEM block, also tile the
    # W axis (free dim of the W-contraction) instead of only shrinking tb.
    b_pad = pl.cdiv(B, tb) * tb
    if b_pad != B:
        x = jnp.pad(x, ((0, b_pad - B), (0, 0), (0, 0)))
    out = _fused_bicubic_downsample(x, dh, dwT, tb)
    return out[:B].reshape(N, C, Ho, Wo)


def downsample(img, n_iter):
    """Equivalent of Downsample(n_iter).forward(img); img is NCHW float."""
    if n_iter <= 0:
        return img
    return _downsample_impl(img, int(n_iter))


# ----------------------------------------------------------------------------
# Pure-JAX per-iteration reference (identical math to PyTorch's bicubic x0.5).
# ----------------------------------------------------------------------------

def _downsample_reference(img, n_iter):
    N, C, H, W = img.shape
    x = img.reshape(N * C, H, W).astype(jnp.float32)
    for _ in range(n_iter):
        dh = jnp.asarray(_downsample_matrix_np(x.shape[1]), jnp.float32)
        dw = jnp.asarray(_downsample_matrix_np(x.shape[2]), jnp.float32)
        x = jnp.einsum('oh,bhw,pw->bop', dh, x, dw)
    return x.reshape(N, C, x.shape[1], x.shape[2]).astype(img.dtype)


if __name__ == "__main__":
    key = jax.random.PRNGKey(0)

    # Main case: (N, C, H, W) = (2, 4, 16, 16), two x0.5 bicubic steps.
    n_iter = 2
    x = jax.random.normal(key, (2, 4, 16, 16), dtype=jnp.float32)
    out = jax.block_until_ready(downsample(x, n_iter))
    ref = _downsample_reference(x, n_iter)
    assert out.shape == (2, 4, 4, 4), out.shape
    assert jnp.allclose(out, ref, atol=1e-4, rtol=1e-4), float(
        jnp.max(jnp.abs(out - ref)))

    # Second case exercises batch padding (B=3 not divisible by tb) and
    # non-square, non-power-of-two spatial dims.
    x2 = jax.random.normal(jax.random.PRNGKey(1), (1, 3, 32, 20), dtype=jnp.float32)
    out2 = jax.block_until_ready(downsample(x2, 1))
    ref2 = _downsample_reference(x2, 1)
    assert out2.shape == (1, 3, 16, 10), out2.shape
    assert jnp.allclose(out2, ref2, atol=1e-4, rtol=1e-4), float(
        jnp.max(jnp.abs(out2 - ref2)))

    print("KERNEL_OK")
</pallas_src>

<mosaic_0001>
module attributes {stable_mosaic.version = 11 : i64} {
  func.func @_fused_downsample_kernel(%arg0: i32, %arg1: memref<4x16xf32, #tpu.memory_space<vmem>>, %arg2: memref<16x4xf32, #tpu.memory_space<vmem>>, %arg3: memref<4x16x16xf32, #tpu.memory_space<vmem>>, %arg4: memref<4x4x4xf32, #tpu.memory_space<vmem>>) attributes {dimension_semantics = [#tpu.dimension_semantics<parallel>], iteration_bounds = array<i64: 2>, scalar_prefetch = 0 : i64, scratch_operands = 0 : i64, tpu.core_type = #tpu.core_type<tc>, window_params = [{pipeline_mode = #tpu.pipeline_mode<synchronous>, transform_indices = @transform_0, window_bounds = array<i64: 4, 16>}, {pipeline_mode = #tpu.pipeline_mode<synchronous>, transform_indices = @transform_1, window_bounds = array<i64: 16, 4>}, {transform_indices = @transform_2, window_bounds = array<i64: 4, 16, 16>}, {transform_indices = @transform_3, window_bounds = array<i64: 4, 4, 4>}]} {
    %c0 = arith.constant 0 : index
    %c0_0 = arith.constant 0 : index
    %c0_1 = arith.constant 0 : index
    %0 = vector.load %arg3[%c0, %c0_0, %c0_1] : memref<4x16x16xf32, #tpu.memory_space<vmem>>, vector<4x16x16xf32>
    %1 = vector.shape_cast %0 : vector<4x16x16xf32> to vector<64x16xf32>
    %c0_2 = arith.constant 0 : index
    %c0_3 = arith.constant 0 : index
    %2 = vector.load %arg2[%c0_2, %c0_3] : memref<16x4xf32, #tpu.memory_space<vmem>>, vector<16x4xf32>
    %cst = arith.constant dense<0.000000e+00> : vector<64x4xf32>
    %3 = tpu.matmul %1, %2, %cst {dimension_numbers = #tpu.dot_dimension_numbers<[1], [0], [0], [1], [0, 0, 1, 1], [], []>} : vector<64x16xf32>, vector<16x4xf32>, vector<64x4xf32> -> vector<64x4xf32>
    %4 = vector.shape_cast %3 : vector<64x4xf32> to vector<4x16x4xf32>
    %c0_4 = arith.constant 0 : index
    %c0_5 = arith.constant 0 : index
    %5 = vector.load %arg1[%c0_4, %c0_5] : memref<4x16xf32, #tpu.memory_space<vmem>>, vector<4x16xf32>
    %6 = vector.shape_cast %5 : vector<4x16xf32> to vector<1x4x16xf32>
    %7 = vector.broadcast %6 : vector<1x4x16xf32> to vector<4x4x16xf32>
    "tpu.trace_start"() <{level = 10 : i32, message = "boh,bhw->bow"}> : () -> ()
    %cst_6 = arith.constant dense<0.000000e+00> : vector<4x4x4xf32>
    %8 = tpu.matmul %7, %4, %cst_6 {dimension_numbers = #tpu.dot_dimension_numbers<[2], [1], [1], [2], [0, 0, 0, 1, 1, 2], [0], [0]>} : vector<4x4x16xf32>, vector<4x16x4xf32>, vector<4x4x4xf32> -> vector<4x4x4xf32>
    "tpu.trace_stop"() : () -> ()
    %c0_7 = arith.constant 0 : index
    %c0_8 = arith.constant 0 : index
    %c0_9 = arith.constant 0 : index
    %9 = vector.load %arg4[%c0_7, %c0_8, %c0_9] : memref<4x4x4xf32, #tpu.memory_space<vmem>>, vector<4x4x4xf32>
    tpu.vector_store %arg4[%c0_7, %c0_8, %c0_9], %8 {strides = array<i32>} : memref<4x4x4xf32, #tpu.memory_space<vmem>>, vector<4x4x4xf32>,
    return
  }
  func.func @transform_0(%arg0: i32) -> (i32, i32) {
    %c0_i32 = arith.constant 0 : i32
    %c0_i32_0 = arith.constant 0 : i32
    %c0_i32_1 = arith.constant 0 : i32
    return %c0_i32, %c0_i32_0 : i32, i32
  }
  func.func @transform_1(%arg0: i32) -> (i32, i32) {
    %c0_i32 = arith.constant 0 : i32
    %c0_i32_0 = arith.constant 0 : i32
    %c0_i32_1 = arith.constant 0 : i32
    return %c0_i32, %c0_i32_0 : i32, i32
  }
  func.func @transform_2(%arg0: i32) -> (i32, i32, i32) {
    %c0_i32 = arith.constant 0 : i32
    %c0_i32_0 = arith.constant 0 : i32
    %c0_i32_1 = arith.constant 0 : i32
    return %arg0, %c0_i32, %c0_i32_0 : i32, i32, i32
  }
  func.func @transform_3(%arg0: i32) -> (i32, i32, i32) {
    %c0_i32 = arith.constant 0 : i32
    %c0_i32_0 = arith.constant 0 : i32
    %c0_i32_1 = arith.constant 0 : i32
    return %arg0, %c0_i32, %c0_i32_0 : i32, i32, i32
  }
}

</mosaic_0001>

<llo_original>
// kernel: _downsample_impl.1
$region0: #{_downsample_impl.1}
  #allocation0 [shape = 'u32[]', space=smem, size = 0x4, offset = 0x4, fixed_abs, tag = 'smem constant byte address 0x4 - core index']
  #allocation1 [shape = 'u32[72,128]{1,0:T(1,128)}', space=vmem, size = 0x9000, scoped, tag = 'internal scratch']
  %s0 = inlined_call_operand.hbm [shape: f32[4,16], index: 0, kind: input, shape index: {}]
  %s1 = inlined_call_operand.hbm [shape: f32[16,4], index: 1, kind: input, shape index: {}]
  %s2 = inlined_call_operand.hbm [shape: f32[8,16,16], index: 2, kind: input, shape index: {}]
  %s3 = inlined_call_operand.hbm [shape: f32[8,4,4], index: 3, kind: output, shape index: {}]
  %s4 = sld [smem:[#allocation0]]
  $region57: #{_downsample_impl.1} parent=0
    _
  %s6 = ssub.s32 1, %s4
  %s7 = scalar_select 0, %s6, %s4
  $region1: #{_downsample_impl.1} parent=0
    #allocation2 [shape = 'u8[2048]{0}', space=vmem, size = 0x800, scoped, tag = 'input window, operand 0, single buffered']
    #allocation3 [shape = 's32[2]{0}', space=sflag, size = 0x8, scoped, tag = 'scoped memory for _downsample_impl.1']
    #allocation4 [shape = 's32[2]{0}', space=sflag, size = 0x8, scoped, tag = 'scoped memory for _downsample_impl.1']
    #allocation5 [shape = 'u8[8192]{0}', space=vmem, size = 0x2000, scoped, tag = 'input window, operand 1, single buffered']
    #allocation6 [shape = 's32[1]{0}', space=sflag, size = 0x4, scoped, tag = 'scoped memory for _downsample_impl.1']
    #allocation7 [shape = 'u8[65536]{0}', space=vmem, size = 0x10000, scoped, tag = 'input window, operand 2']
    #allocation8 [shape = 'u8[16384]{0}', space=vmem, size = 0x4000, scoped, tag = 'output window, operand 0']
    %8 = vsyncpa [#allocation3], 0
    %9 = vsyncpa [#allocation6], 0
    %10 = vsyncpa [#allocation4], 0
    %s11 = scalar_lea.sflag [#allocation4], 1
    %12 = vsyncpa %s11, 0
    loop: start=0, step=1, limit=4
    $region2: #{_downsample_impl.1} parent=1 // loop_pre_header
      _
    $region3: #{_downsample_impl.1} parent=1 // loop_header
      %s14 = sphi 0, %s18
      %p15 = scmp.ge.s32.totalorder %s14, 4
      %s22 = sphi 0, %s22
      %s24 = sphi 0, %s22
      %s25 = sphi 0, %s24
      %s39 = sphi 0, %s25
      %s43 = sphi 0, %s43
      %s45 = sphi 0, %s43
      %s46 = sphi 0, %s45
      %s60 = sphi 0, %s46
      %s66 = sphi 0, %s68
      %s69 = sphi 0, %s66
      %s70 = sphi 0, %s69
      %s86 = sphi 0, %s70
      %s92 = sphi 0, %s94
      %s95 = sphi 0, %s92
      %s96 = sphi 0, %s95
      %s112 = sphi 0, %s96
    $region4: #{_downsample_impl.1} parent=1 // loop_header_branch
      %17 = sbr.rel (%p15) target = $region8
    $region5: #{_downsample_impl.1} parent=1 // loop_body
      %s19 = ssub.s32 %s14, 1
      %s20 = ssub.s32 %s14, 2
      %s21 = sadd.s32 %s14, 1
      %s23 = sadd.s32 %s22, 1
      %p26 = scmp.eq.s32.totalorder %s14, 1
      %p27 = scmp.ne.s32.totalorder %s22, %s24
      %p28 = scmp.eq.s32.totalorder %s14, 0
      %p29 = por %p27, %p28
      %p30 = scmp.ne.s32.totalorder %s22, %s24
      %p31 = scmp.eq.s32.totalorder %s19, 1
      %p32 = por %p30, %p31
      %p33 = scmp.ne.s32.totalorder %s24, %s25
      %p34 = scmp.eq.s32.totalorder %s19, 0
      %p35 = por %p33, %p34
      %p36 = scmp.ne.s32.totalorder %s24, %s25
      %p37 = scmp.eq.s32.totalorder %s20, 1
      %p38 = por %p36, %p37
      %p40 = scmp.ne.s32.totalorder %s25, %s39
      %p41 = scmp.eq.s32.totalorder %s20, 0
      %p42 = por %p40, %p41
      %s44 = sadd.s32 %s43, 1
      %p47 = scmp.eq.s32.totalorder %s14, 1
      %p48 = scmp.ne.s32.totalorder %s43, %s45
      %p49 = scmp.eq.s32.totalorder %s14, 0
      %p50 = por %p48, %p49
      %p51 = scmp.ne.s32.totalorder %s43, %s45
      %p52 = scmp.eq.s32.totalorder %s19, 1
      %p53 = por %p51, %p52
      %p54 = scmp.ne.s32.totalorder %s45, %s46
      %p55 = scmp.eq.s32.totalorder %s19, 0
      %p56 = por %p54, %p55
      %p57 = scmp.ne.s32.totalorder %s45, %s46
      %p58 = scmp.eq.s32.totalorder %s20, 1
      %p59 = por %p57, %p58
      %p61 = scmp.ne.s32.totalorder %s46, %s60
      %p62 = scmp.eq.s32.totalorder %s20, 0
      %p63 = por %p61, %p62
      %s64 = ssub.s32 %s14, %s21
      %p65 = scmp.eq.s32.totalorder %s64, 0
      %s67 = sadd.s32 %s66, 1
      %s68 = scalar_select %p65, %s66, %s67
      %p71 = pneg %p65
      %p72 = scmp.eq.s32.totalorder %s14, 1
      %p73 = por %p71, %p72
      %p74 = scmp.ne.s32.totalorder %s66, %s69
      %p75 = scmp.eq.s32.totalorder %s14, 0
      %p76 = por %p74, %p75
      %p77 = scmp.ne.s32.totalorder %s66, %s69
      %p78 = scmp.eq.s32.totalorder %s19, 1
      %p79 = por %p77, %p78
      %p80 = scmp.ne.s32.totalorder %s69, %s70
      %p81 = scmp.eq.s32.totalorder %s19, 0
      %p82 = por %p80, %p81
      %p83 = scmp.ne.s32.totalorder %s69, %s70
      %p84 = scmp.eq.s32.totalorder %s20, 1
      %p85 = por %p83, %p84
      %p87 = scmp.ne.s32.totalorder %s70, %s86
      %p88 = scmp.eq.s32.totalorder %s20, 0
      %p89 = por %p87, %p88
      %s90 = ssub.s32 %s14, %s21
      %p91 = scmp.eq.s32.totalorder %s90, 0
      %s93 = sadd.s32 %s92, 1
      %s94 = scalar_select %p91, %s92, %s93
      %p97 = pneg %p91
      %p98 = scmp.eq.s32.totalorder %s14, 1
      %p99 = por %p97, %p98
      %p100 = scmp.ne.s32.totalorder %s92, %s95
      %p101 = scmp.eq.s32.totalorder %s14, 0
      %p102 = por %p100, %p101
      %p103 = scmp.ne.s32.totalorder %s92, %s95
      %p104 = scmp.eq.s32.totalorder %s19, 1
      %p105 = por %p103, %p104
      %p106 = scmp.ne.s32.totalorder %s95, %s96
      %p107 = scmp.eq.s32.totalorder %s19, 0
      %p108 = por %p106, %p107
      %p109 = scmp.ne.s32.totalorder %s95, %s96
      %p110 = scmp.eq.s32.totalorder %s20, 1
      %p111 = por %p109, %p110
      %p113 = scmp.ne.s32.totalorder %s96, %s112
      %p114 = scmp.eq.s32.totalorder %s20, 0
      %p115 = por %p113, %p114
      %p116 = scmp.le.s32.totalorder 1, %s14
      %p117 = scmp.lt.s32.totalorder %s14, 3
      %p118 = pnand %p116, %p117
      %p119 = pneg %p118
      // Predicated region
      $region9: #{_downsample_impl.1} parent=5 // pred_check
        _
      $region10: #{_downsample_impl.1} parent=5 // pred_check_branch
        %121 = sbr.rel (%p118) target = $region12
      $region11: #{_downsample_impl.1} parent=5 // pred_region
        %s122 = ssub.s32 %s14, 1
        // Predicated region
        $region13: #{_downsample_impl.1} parent=11 // pred_check
          %p123 = pneg %p35
        $region14: #{_downsample_impl.1} parent=11 // pred_check_branch
          %125 = sbr.rel (%p123) target = $region16
        $region15: #{_downsample_impl.1} parent=11 // pred_region
          %127 = vsyncadd [#allocation3], 0
          %s129 = sshll.u32 %s0, 4
          %s130 = int_to_ptr.hbm [resolvable:$true] %s129
          %s131 = sshll.u32 [#allocation2], 4
          %s132 = int_to_ptr.vmem [resolvable:$true] %s131
          %134 = dma.hbm_to_vmem [thread:$0]  %s130, 64, %s132, [#allocation3]
        $region16: #{_downsample_impl.1} parent=11 // pred_fallthru
          _
        // Predicated region
        $region17: #{_downsample_impl.1} parent=11 // pred_check
          %p135 = pneg %p56
        $region18: #{_downsample_impl.1} parent=11 // pred_check_branch
          %137 = sbr.rel (%p135) target = $region20
        $region19: #{_downsample_impl.1} parent=11 // pred_region
          %139 = vsyncadd [#allocation6], 0
          %s140 = sshll.u32 %s1, 4
          %s141 = int_to_ptr.hbm [resolvable:$true] %s140
          %s142 = sshll.u32 [#allocation5], 4
          %s143 = int_to_ptr.vmem [resolvable:$true] %s142
          %148 = dma.hbm_to_vmem [thread:$0]  %s141, 256, %s143, [#allocation6], 128, 128, 8
        $region20: #{_downsample_impl.1} parent=11 // pred_fallthru
          _
      $region12: #{_downsample_impl.1} parent=5 // pred_fallthru
        _
      %p149 = scmp.lt.s32.totalorder %s14, 2
      // Predicated region
      $region21: #{_downsample_impl.1} parent=5 // pred_check
        %p150 = pneg %p149
      $region22: #{_downsample_impl.1} parent=5 // pred_check_branch
        %152 = sbr.rel (%p150) target = $region24
      $region23: #{_downsample_impl.1} parent=5 // pred_region
        // Predicated region
        $region25: #{_downsample_impl.1} parent=23 // pred_check
          %p153 = pneg %p76
        $region26: #{_downsample_impl.1} parent=23 // pred_check_branch
          %155 = sbr.rel (%p153) target = $region28
        $region27: #{_downsample_impl.1} parent=23 // pred_region
          %s156 = sand.u32 %s14, 1
          %s157 = scalar_lea.sflag [#allocation3], %s156
          %s158 = sand.u32 %s66, 1
          %s159 = smul.addr %s158, 64
          %s160 = scalar_lea.vmem [#allocation7], %s159
          %s161 = smul.u32 4, %s14
          %163 = vsyncadd %s157, 0
          %s164 = smul.addr %s161, 2
          %s165 = smul.addr %s164, 8
          %s166 = scalar_lea.hbm %s2, %s165
          %s167 = sshll.u32 %s166, 4
          %s168 = int_to_ptr.hbm [resolvable:$true] %s167
          %s169 = sshll.u32 %s160, 4
          %s170 = int_to_ptr.vmem [resolvable:$true] %s169
          %175 = dma.hbm_to_vmem [thread:$0]  %s168, 1024, %s170, %s157, 128, 128, 8
        $region28: #{_downsample_impl.1} parent=23 // pred_fallthru
          _
      $region24: #{_downsample_impl.1} parent=5 // pred_fallthru
        _
      %p176 = scmp.le.s32.totalorder 1, %s14
      %p177 = scmp.lt.s32.totalorder %s14, 3
      %p178 = pnand %p176, %p177
      %p179 = pneg %p178
      // Predicated region
      $region29: #{_downsample_impl.1} parent=5 // pred_check
        _
      $region30: #{_downsample_impl.1} parent=5 // pred_check_branch
        %181 = sbr.rel (%p178) target = $region32
      $region31: #{_downsample_impl.1} parent=5 // pred_region
        %s182 = ssub.s32 %s14, 1
        // Predicated region
        $region33: #{_downsample_impl.1} parent=31 // pred_check
          %p183 = pneg %p35
        $region34: #{_downsample_impl.1} parent=31 // pred_check_branch
          %185 = sbr.rel (%p183) target = $region36
        $region35: #{_downsample_impl.1} parent=31 // pred_region
          %187 = dma.done [#allocation3], 64
        $region36: #{_downsample_impl.1} parent=31 // pred_fallthru
          _
        // Predicated region
        $region37: #{_downsample_impl.1} parent=31 // pred_check
          %p188 = pneg %p56
        $region38: #{_downsample_impl.1} parent=31 // pred_check_branch
          %190 = sbr.rel (%p188) target = $region40
        $region39: #{_downsample_impl.1} parent=31 // pred_region
          %192 = dma.done [#allocation6], 256
        $region40: #{_downsample_impl.1} parent=31 // pred_fallthru
          _
        %s193 = sand.u32 %s19, 1
        %s194 = scalar_lea.sflag [#allocation3], %s193
        %s195 = sand.u32 %s69, 1
        %s196 = smul.addr %s195, 64
        %s197 = scalar_lea.vmem [#allocation7], %s196
        // Predicated region
        $region41: #{_downsample_impl.1} parent=31 // pred_check
          %p198 = pneg %p82
        $region42: #{_downsample_impl.1} parent=31 // pred_check_branch
          %200 = sbr.rel (%p198) target = $region44
        $region43: #{_downsample_impl.1} parent=31 // pred_region
          %202 = dma.done %s194, 1024
        $region44: #{_downsample_impl.1} parent=31 // pred_fallthru
          _
        %p203 = pneg %p35
        %p204 = pneg %p32
        %p205 = pneg %p56
        %p206 = pneg %p53
        %s207 = sand.u32 %s19, 1
        %s208 = scalar_lea.sflag [#allocation3], %s207
        %s209 = sand.u32 %s69, 1
        %s210 = smul.addr %s209, 64
        %s211 = scalar_lea.vmem [#allocation7], %s210
        %p212 = pneg %p82
        %p213 = pneg %p79
        %p214 = pneg %p108
        %p215 = pneg %p105
        %s216 = sand.u32 %s95, 1
        %s217 = scalar_lea.sflag [#allocation4], %s216
        %s218 = sand.u32 %s95, 1
        %s219 = smul.addr %s218, 16
        %s220 = scalar_lea.vmem [#allocation8], %s219
        %s221 = smul.u32 4, %s19
        %s222 = smul.u32 4, %s19
        %v223 = vld [vmem:[%s197] sm:$0xff]
        %v224 = vld [vmem:[%s197 + $0x8] sm:$0xff]
        %v225 = vld [vmem:[%s197 + $0x10] sm:$0xff]
        %v226 = vld [vmem:[%s197 + $0x18] sm:$0xff]
        %v227 = vld [vmem:[%s197 + $0x20] sm:$0xff]
        %v228 = vld [vmem:[%s197 + $0x28] sm:$0xff]
        %v229 = vld [vmem:[%s197 + $0x30] sm:$0xff]
        %v230 = vld [vmem:[%s197 + $0x38] sm:$0xff]
        %v231 = vld [vmem:[#allocation5] sm:$0xff]
        %v232 = vld [vmem:[#allocation5 + $0x8] sm:$0xff]
        %vm233 = vcmask 130048
        %v235 = vsel %vm233, %v223, 0
        %v238 = vsel %vm233, %v224, 0
        %v241 = vsel %vm233, %v225, 0
        %v244 = vsel %vm233, %v226, 0
        %v247 = vsel %vm233, %v227, 0
        %v250 = vsel %vm233, %v228, 0
        %v253 = vsel %vm233, %v229, 0
        %v256 = vsel %vm233, %v230, 0
        %258 = vmatpush.msra.mxu0 0.0
        %259 = vmatpush.msra.mxu0 0.0
        %260 = vmatpush.msra.mxu0 0.0
        %261 = vmatpush.msra.mxu0 0.0
        %262 = vmatpush.msra.mxu0 0.0
        %263 = vmatpush.msra.mxu0 0.0
        %264 = vmatpush.msra.mxu0 0.0
        %265 = vmatpush.msra.mxu0 0.0
        %266 = vmatpush.msra.mxu0 0.0
        %267 = vmatpush.msra.mxu0 0.0
        %268 = vmatpush.msra.mxu0 0.0
        %269 = vmatpush.msra.mxu0 0.0
        %270 = vmatpush.msra.mxu0 0.0
        %271 = vmatpush.msra.mxu0 0.0
        %272 = vmatpush.msra.mxu0 %v232
        %273 = vmatpush.msra.mxu0 %v231
        %274 = vmatmul.f32.gmra.mxu0 %v235
        %v275 = vpop.f32.mrf.mxu0
        %v276 = vadd.f32 0.0, %v275
        %277 = vmatmul.f32.gmra.mxu0 %v238
        %v278 = vpop.f32.mrf.mxu0
        %v279 = vadd.f32 0.0, %v278
        %280 = vmatmul.f32.gmra.mxu0 %v241
        %v281 = vpop.f32.mrf.mxu0
        %v282 = vadd.f32 0.0, %v281
        %283 = vmatmul.f32.gmra.mxu0 %v244
        %v284 = vpop.f32.mrf.mxu0
        %v285 = vadd.f32 0.0, %v284
        %286 = vmatmul.f32.gmra.mxu0 %v247
        %v287 = vpop.f32.mrf.mxu0
        %v288 = vadd.f32 0.0, %v287
        %289 = vmatmul.f32.gmra.mxu0 %v250
        %v290 = vpop.f32.mrf.mxu0
        %v291 = vadd.f32 0.0, %v290
        %292 = vmatmul.f32.gmra.mxu0 %v253
        %v293 = vpop.f32.mrf.mxu0
        %v294 = vadd.f32 0.0, %v293
        %295 = vmatmul.f32.gmra.mxu0 %v256
        %v296 = vpop.f32.mrf.mxu0
        %v297 = vadd.f32 0.0, %v296
        %298 = vdwg.mxu0
        %v299 = vld [vmem:[#allocation2] sm:$0xf]
        %v301 = vsel %vm233, %v299, 0
        %303 = vmatpush.msra.mxu0 0.0
        %304 = vmatpush.msra.mxu0 0.0
        %305 = vmatpush.msra.mxu0 0.0
        %306 = vmatpush.msra.mxu0 0.0
        %307 = vmatpush.msra.mxu0 0.0
        %308 = vmatpush.msra.mxu0 0.0
        %309 = vmatpush.msra.mxu0 0.0
        %310 = vmatpush.msra.mxu0 0.0
        %311 = vmatpush.msra.mxu0 0.0
        %312 = vmatpush.msra.mxu0 0.0
        %313 = vmatpush.msra.mxu0 0.0
        %314 = vmatpush.msra.mxu0 0.0
        %315 = vmatpush.msra.mxu0 0.0
        %316 = vmatpush.msra.mxu0 0.0
        %317 = vmatpush.msra.mxu0 %v279
        %318 = vmatpush.msra.mxu0 %v276
        %319 = vmatmul.f32.gmra.mxu0 %v301
        %v320 = vpop.f32.mrf.mxu0
        %v321 = vadd.f32 0.0, %v320
        %322 = vdwg.mxu0
        %323 = vmatpush.msra.mxu0 0.0
        %324 = vmatpush.msra.mxu0 0.0
        %325 = vmatpush.msra.mxu0 0.0
        %326 = vmatpush.msra.mxu0 0.0
        %327 = vmatpush.msra.mxu0 0.0
        %328 = vmatpush.msra.mxu0 0.0
        %329 = vmatpush.msra.mxu0 0.0
        %330 = vmatpush.msra.mxu0 0.0
        %331 = vmatpush.msra.mxu0 0.0
        %332 = vmatpush.msra.mxu0 0.0
        %333 = vmatpush.msra.mxu0 0.0
        %334 = vmatpush.msra.mxu0 0.0
        %335 = vmatpush.msra.mxu0 0.0
        %336 = vmatpush.msra.mxu0 0.0
        %337 = vmatpush.msra.mxu0 %v285
        %338 = vmatpush.msra.mxu0 %v282
        %339 = vmatmul.f32.gmra.mxu0 %v301
        %v340 = vpop.f32.mrf.mxu0
        %v341 = vadd.f32 0.0, %v340
        %342 = vdwg.mxu0
        %343 = vmatpush.msra.mxu0 0.0
        %344 = vmatpush.msra.mxu0 0.0
        %345 = vmatpush.msra.mxu0 0.0
        %346 = vmatpush.msra.mxu0 0.0
        %347 = vmatpush.msra.mxu0 0.0
        %348 = vmatpush.msra.mxu0 0.0
        %349 = vmatpush.msra.mxu0 0.0
        %350 = vmatpush.msra.mxu0 0.0
        %351 = vmatpush.msra.mxu0 0.0
        %352 = vmatpush.msra.mxu0 0.0
        %353 = vmatpush.msra.mxu0 0.0
        %354 = vmatpush.msra.mxu0 0.0
        %355 = vmatpush.msra.mxu0 0.0
        %356 = vmatpush.msra.mxu0 0.0
        %357 = vmatpush.msra.mxu0 %v291
        %358 = vmatpush.msra.mxu0 %v288
        %359 = vmatmul.f32.gmra.mxu0 %v301
        %v360 = vpop.f32.mrf.mxu0
        %v361 = vadd.f32 0.0, %v360
        %362 = vdwg.mxu0
        %363 = vmatpush.msra.mxu0 0.0
        %364 = vmatpush.msra.mxu0 0.0
        %365 = vmatpush.msra.mxu0 0.0
        %366 = vmatpush.msra.mxu0 0.0
        %367 = vmatpush.msra.mxu0 0.0
        %368 = vmatpush.msra.mxu0 0.0
        %369 = vmatpush.msra.mxu0 0.0
        %370 = vmatpush.msra.mxu0 0.0
        %371 = vmatpush.msra.mxu0 0.0
        %372 = vmatpush.msra.mxu0 0.0
        %373 = vmatpush.msra.mxu0 0.0
        %374 = vmatpush.msra.mxu0 0.0
        %375 = vmatpush.msra.mxu0 0.0
        %376 = vmatpush.msra.mxu0 0.0
        %377 = vmatpush.msra.mxu0 %v297
        %378 = vmatpush.msra.mxu0 %v294
        %379 = vmatmul.f32.gmra.mxu0 %v301
        %v380 = vpop.f32.mrf.mxu0
        %v381 = vadd.f32 0.0, %v380
        %382 = vdwg.mxu0
        %vm383 = vcmask 27648
        %384 = vst.msk [vmem:[%s220] sm:$0xf] %vm383, %v321
        %385 = vst.msk [vmem:[%s220 + $0x4] sm:$0xf] %vm383, %v341
        %386 = vst.msk [vmem:[%s220 + $0x8] sm:$0xf] %vm383, %v361
        %387 = vst.msk [vmem:[%s220 + $0xc] sm:$0xf] %vm383, %v381
        %s388 = sand.u32 %s95, 1
        %s389 = scalar_lea.sflag [#allocation4], %s388
        %s390 = sand.u32 %s95, 1
        %s391 = smul.addr %s390, 16
        %s392 = scalar_lea.vmem [#allocation8], %s391
        // Predicated region
        $region45: #{_downsample_impl.1} parent=31 // pred_check
          %p393 = pneg %p105
        $region46: #{_downsample_impl.1} parent=31 // pred_check_branch
          %395 = sbr.rel (%p393) target = $region48
        $region47: #{_downsample_impl.1} parent=31 // pred_region
          %s396 = smul.u32 4, %s19
          %398 = vsyncadd %s389, 0
          %s399 = smul.addr %s396, 4
          %s400 = scalar_lea.hbm %s3, %s399
          %s401 = sshll.u32 %s392, 4
          %s402 = int_to_ptr.vmem [resolvable:$true] %s401
          %s403 = sshll.u32 %s400, 4
          %s404 = int_to_ptr.hbm [resolvable:$true] %s403
          %409 = dma.vmem_to_hbm [thread:$0]  %s402, 256, %s404, %s389, 64, 64, 4
        $region48: #{_downsample_impl.1} parent=31 // pred_fallthru
          _
      $region32: #{_downsample_impl.1} parent=5 // pred_fallthru
        _
      %p410 = scmp.le.s32.totalorder 2, %s14
      // Predicated region
      $region49: #{_downsample_impl.1} parent=5 // pred_check
        %p411 = pneg %p410
      $region50: #{_downsample_impl.1} parent=5 // pred_check_branch
        %413 = sbr.rel (%p411) target = $region52
      $region51: #{_downsample_impl.1} parent=5 // pred_region
        %s414 = ssub.s32 %s14, 2
        // Predicated region
        $region53: #{_downsample_impl.1} parent=51 // pred_check
          %p415 = pneg %p111
        $region54: #{_downsample_impl.1} parent=51 // pred_check_branch
          %417 = sbr.rel (%p415) target = $region56
        $region55: #{_downsample_impl.1} parent=51 // pred_region
          %s418 = sand.u32 %s96, 1
          %s419 = scalar_lea.sflag [#allocation4], %s418
          %s420 = sand.u32 %s96, 1
          %s421 = smul.addr %s420, 16
          %s422 = scalar_lea.vmem [#allocation8], %s421
          %424 = dma.done %s419, 256
        $region56: #{_downsample_impl.1} parent=51 // pred_fallthru
          _
      $region52: #{_downsample_impl.1} parent=5 // pred_fallthru
        _
    $region6: #{_downsample_impl.1} parent=1 // loop_footer
      %s18 = sadd.s32 1, %s14
    $region7: #{_downsample_impl.1} parent=1 // loop_footer_branch
      %13 = sbr.rel target = $region3
    $region8: #{_downsample_impl.1} parent=1 // loop_exit
      _
    %425 = vsyncpa [#allocation3], 1
    %s426 = scalar_lea.sflag [#allocation3], 1
    %427 = vsyncpa %s426, 1
    %428 = vsyncpa [#allocation6], 1
    %429 = vsyncpa [#allocation4], 1
    %s430 = scalar_lea.sflag [#allocation4], 1
    %431 = vsyncpa %s430, 1

</llo_original>
